<compile_context>
chip_gen: v7x
topology: tpu7x:2x2x1
jax: 0.10.0
libtpu: 0.0.40
codegen_flags: <defaults>
</compile_context>

<pallas_src>
import math
import numpy as np

import jax
import jax.numpy as jnp
from jax.experimental import pallas as pl
from jax.experimental.pallas import tpu as pltpu


def _emb_kernel_matmul(x_ref, f_ref, offs_ref, out_ref):
    # x_ref:(rb, pack)  f_ref:(pack, W)  offs_ref:(1, W)  out_ref:(rb, W)
    phase = jnp.dot(x_ref[...], f_ref[...],
                    preferred_element_type=jnp.float32,
                    precision=jax.lax.Precision.HIGHEST)
    out_ref[...] = jnp.sin(phase + offs_ref[...]).astype(out_ref.dtype)


def _emb_kernel_outer(x_ref, f_ref, offs_ref, out_ref):
    # pack == 1 fallback: (rb, 1) * (1, W) broadcast on the VPU (no MXU needed).
    phase = x_ref[...] * f_ref[...]
    out_ref[...] = jnp.sin(phase + offs_ref[...]).astype(out_ref.dtype)


def _build_tables(emb_dim, half_dim, pack, exponent, flip_sin_to_cos):
    """Trace-time (numpy) construction of the freq-selection matrix F and the
    per-lane pi/2 offset row (cos lanes) for the packed (pack*emb_dim)-lane row."""
    W = pack * emb_dim
    lane = np.arange(W)
    f = lane % emb_dim                      # feature index within one embedding
    group = lane // emb_dim                 # which packed timestep owns the lane

    in_sin_half = f < half_dim
    in_cos_half = (f >= half_dim) & (f < 2 * half_dim)
    pad_lane = f >= 2 * half_dim            # only non-empty for odd emb_dim

    freq_idx = np.where(in_sin_half, f, f - half_dim)
    freq_idx = np.where(pad_lane, 0, freq_idx)
    freq = np.exp(-exponent * freq_idx.astype(np.float64)).astype(np.float32)
    freq = np.where(pad_lane, np.float32(0.0), freq)

    # cos(x) == sin(x + pi/2): offset only the cos lanes; pad lanes stay 0.
    is_cos = in_sin_half if flip_sin_to_cos else in_cos_half
    offs = np.where(is_cos, np.float32(np.pi / 2), np.float32(0.0))

    F = np.zeros((pack, W), np.float32)
    F[group, lane] = freq                   # F[p, l] = freq(l) iff l//emb_dim == p
    return jnp.asarray(F), jnp.asarray(offs.reshape(1, W).astype(np.float32))


def sinusoidal_pos_emb(x, *, emb_dim=16, downscale_freq_shift=1,
                       max_period=10000, flip_sin_to_cos=False,
                       row_block=2048, out_dtype=jnp.float32):
    """Pallas TPU implementation of SinusoidalPosEmb.forward.

    x: (B,) array of timesteps (any float/int dtype; promoted to float32).
    returns: (B, emb_dim) array of dtype `out_dtype` (float32 by default).
    """
    x = jnp.asarray(x, jnp.float32)
    assert x.ndim == 1, "x must be a 1-D vector of timesteps"
    if emb_dim < 2:
        raise ValueError("emb_dim must be >= 2")
    half_dim = emb_dim // 2
    if half_dim == downscale_freq_shift:
        raise ValueError("half_dim == downscale_freq_shift -> division by zero")
    assert row_block % 8 == 0, "row_block must be a multiple of 8"
    exponent = math.log(max_period) / (half_dim - downscale_freq_shift)

    B = x.shape[0]

    # Lane-dense packing: `pack` timesteps per 128-lane output row when possible.
    if emb_dim <= 128 and 128 % emb_dim == 0:
        pack = 128 // emb_dim
    else:
        pack = 1                      # fallback (odd / non-dividing emb_dim)
    W = pack * emb_dim

    rows = -(-B // pack)              # ceil
    B_pad = rows * pack
    if B_pad != B:
        # TODO(synk): callers that can tolerate padded rows should pass B as a
        # multiple of `pack` so this pad and the trailing slice disappear.
        x = jnp.pad(x, (0, B_pad - B))
    x2 = x.reshape(rows, pack)

    # Row tiling:
    #  * rows >  row_block        -> row_block rows per step (pipelined writeback).
    #  * 256 <= rows <= row_block -> split into 2 blocks so v7x's two TensorCores
    #                                both get work ("parallel" grid axis).
    #  * small rows               -> single full block (minimise step overhead).
    _MIN_SPLIT_ROWS = 256
    if rows > row_block:
        rb = row_block
    elif rows >= _MIN_SPLIT_ROWS:
        half_rows = -(-rows // 2)
        rb = -(-half_rows // 32) * 32          # round_up(ceil(rows/2), 32)
    else:
        rb = rows
    grid = (pl.cdiv(rows, rb),)

    F, offs = _build_tables(emb_dim, half_dim, pack, exponent, flip_sin_to_cos)
    kernel = _emb_kernel_matmul if pack > 1 else _emb_kernel_outer

    out = pl.pallas_call(
        kernel,
        out_shape=jax.ShapeDtypeStruct((rows, W), out_dtype),
        grid=grid,
        in_specs=[pl.BlockSpec((rb, pack), lambda i: (i, 0)),
                  pl.BlockSpec((pack, W), lambda i: (0, 0)),   # resident table
                  pl.BlockSpec((1, W), lambda i: (0, 0))],     # resident table
        out_specs=pl.BlockSpec((rb, W), lambda i: (i, 0)),
        compiler_params=pltpu.CompilerParams(
            dimension_semantics=("parallel",)),
    )(x2, F, offs)

    # Row-major (rows, W) has exactly the bytes of (B_pad, emb_dim): free reshape.
    out = out.reshape(B_pad, emb_dim)
    if B_pad != B:
        out = out[:B]
    return out


def _reference(x, *, emb_dim=16, downscale_freq_shift=1,
               max_period=10000, flip_sin_to_cos=False):
    x = jnp.asarray(x, jnp.float32)
    half = emb_dim // 2
    e = math.log(max_period) / (half - downscale_freq_shift)
    freqs = jnp.exp(-e * jnp.arange(half, dtype=jnp.float32))
    emb = x[:, None] * freqs[None, :]
    emb = jnp.concatenate([jnp.sin(emb), jnp.cos(emb)], axis=-1)
    if flip_sin_to_cos:
        emb = jnp.concatenate([emb[:, half:], emb[:, :half]], axis=-1)
    if emb_dim % 2 == 1:
        emb = jnp.pad(emb, ((0, 0), (0, 1)))
    return emb


if __name__ == "__main__":
    key = jax.random.PRNGKey(0)
    k0, k1, k2, k3, k4 = jax.random.split(key, 5)

    # Tolerance note: phases reach ~1e3 (timestep * freq0=1); f32 rounding of
    # (phase + pi/2) and MXU bf16x3 passes add ~1e-4 absolute error vs the
    # plain-XLA reference, so we compare at 1e-3.
    TOL = dict(atol=1e-3, rtol=1e-3)

    # Typical diffusion-style timesteps (single grid step, packed 8/row).
    B, emb_dim = 8, 16
    x = jax.random.randint(k0, (B,), 0, 1000).astype(jnp.float32)
    out = jax.block_until_ready(sinusoidal_pos_emb(x, emb_dim=emb_dim))
    ref = _reference(x, emb_dim=emb_dim)
    assert out.shape == (B, emb_dim), out.shape
    assert jnp.allclose(out, ref, **TOL), float(jnp.max(jnp.abs(out - ref)))

    # flip_sin_to_cos path.
    out_f = jax.block_until_ready(
        sinusoidal_pos_emb(x, emb_dim=emb_dim, flip_sin_to_cos=True))
    ref_f = _reference(x, emb_dim=emb_dim, flip_sin_to_cos=True)
    assert jnp.allclose(out_f, ref_f, **TOL)

    # Multi-step pipelined grid + unaligned-B pad/slice path (B % pack != 0,
    # rows > row_block), tiny shapes on purpose.
    x_big = jax.random.randint(k1, (200,), 0, 1000).astype(jnp.float32)
    out_big = jax.block_until_ready(
        sinusoidal_pos_emb(x_big, emb_dim=16, row_block=8))
    ref_big = _reference(x_big, emb_dim=16)
    assert out_big.shape == (200, 16)
    assert jnp.allclose(out_big, ref_big, **TOL)

    # Two-block split path (rows >= 256 -> grid of 2 for v7x core parallelism).
    x_split = jax.random.randint(k2, (2056,), 0, 1000).astype(jnp.float32)
    out_split = jax.block_until_ready(sinusoidal_pos_emb(x_split, emb_dim=16))
    ref_split = _reference(x_split, emb_dim=16)
    assert out_split.shape == (2056, 16)
    assert jnp.allclose(out_split, ref_split, **TOL)

    # Odd emb_dim fallback (pack=1, outer-product kernel, in-kernel pad column).
    x_odd = jax.random.randint(k3, (5,), 0, 1000).astype(jnp.float32)
    out_odd = jax.block_until_ready(sinusoidal_pos_emb(x_odd, emb_dim=7))
    ref_odd = _reference(x_odd, emb_dim=7)
    assert out_odd.shape == (5, 7)
    assert jnp.allclose(out_odd, ref_odd, **TOL)

    # Optional bf16 output (f32 compute, narrow store).
    x_bf = jax.random.randint(k4, (128,), 0, 1000).astype(jnp.float32)
    out_bf = jax.block_until_ready(
        sinusoidal_pos_emb(x_bf, emb_dim=16, out_dtype=jnp.bfloat16))
    ref_bf = _reference(x_bf, emb_dim=16)
    assert out_bf.dtype == jnp.bfloat16
    assert jnp.allclose(out_bf.astype(jnp.float32), ref_bf, atol=2e-2, rtol=2e-2)

    print("KERNEL_OK")
</pallas_src>

<mosaic_0001>
module attributes {stable_mosaic.version = 11 : i64} {
  func.func @_emb_kernel_matmul(%arg0: i32, %arg1: memref<1x8xf32, #tpu.memory_space<vmem>>, %arg2: memref<8x128xf32, #tpu.memory_space<vmem>>, %arg3: memref<1x128xf32, #tpu.memory_space<vmem>>, %arg4: memref<1x128xf32, #tpu.memory_space<vmem>>) attributes {dimension_semantics = [#tpu.dimension_semantics<parallel>], iteration_bounds = array<i64: 1>, scalar_prefetch = 0 : i64, scratch_operands = 0 : i64, tpu.core_type = #tpu.core_type<tc>, window_params = [{transform_indices = @transform_0, window_bounds = array<i64: 1, 8>}, {pipeline_mode = #tpu.pipeline_mode<synchronous>, transform_indices = @transform_1, window_bounds = array<i64: 8, 128>}, {pipeline_mode = #tpu.pipeline_mode<synchronous>, transform_indices = @transform_2, window_bounds = array<i64: 1, 128>}, {transform_indices = @transform_3, window_bounds = array<i64: 1, 128>}]} {
    %c0 = arith.constant 0 : index
    %c0_0 = arith.constant 0 : index
    %0 = vector.load %arg1[%c0, %c0_0] : memref<1x8xf32, #tpu.memory_space<vmem>>, vector<1x8xf32>
    %c0_1 = arith.constant 0 : index
    %c0_2 = arith.constant 0 : index
    %1 = vector.load %arg2[%c0_1, %c0_2] : memref<8x128xf32, #tpu.memory_space<vmem>>, vector<8x128xf32>
    %cst = arith.constant dense<0.000000e+00> : vector<1x128xf32>
    %2 = tpu.matmul %0, %1, %cst {dimension_numbers = #tpu.dot_dimension_numbers<[1], [0], [0], [1], [0, 0, 1, 1], [], []>, precision = #tpu.contract_precision<fp32>} : vector<1x8xf32>, vector<8x128xf32>, vector<1x128xf32> -> vector<1x128xf32>
    %c0_3 = arith.constant 0 : index
    %c0_4 = arith.constant 0 : index
    %3 = vector.load %arg3[%c0_3, %c0_4] : memref<1x128xf32, #tpu.memory_space<vmem>>, vector<1x128xf32>
    %4 = arith.addf %2, %3 : vector<1x128xf32>
    %5 = math.sin %4 : vector<1x128xf32>
    %c0_5 = arith.constant 0 : index
    %c0_6 = arith.constant 0 : index
    %6 = vector.load %arg4[%c0_5, %c0_6] : memref<1x128xf32, #tpu.memory_space<vmem>>, vector<1x128xf32>
    tpu.vector_store %arg4[%c0_5, %c0_6], %5 {strides = array<i32>} : memref<1x128xf32, #tpu.memory_space<vmem>>, vector<1x128xf32>,
    return
  }
  func.func @transform_0(%arg0: i32) -> (i32, i32) {
    %c0_i32 = arith.constant 0 : i32
    %c0_i32_0 = arith.constant 0 : i32
    return %arg0, %c0_i32 : i32, i32
  }
  func.func @transform_1(%arg0: i32) -> (i32, i32) {
    %c0_i32 = arith.constant 0 : i32
    %c0_i32_0 = arith.constant 0 : i32
    %c0_i32_1 = arith.constant 0 : i32
    return %c0_i32, %c0_i32_0 : i32, i32
  }
  func.func @transform_2(%arg0: i32) -> (i32, i32) {
    %c0_i32 = arith.constant 0 : i32
    %c0_i32_0 = arith.constant 0 : i32
    %c0_i32_1 = arith.constant 0 : i32
    return %c0_i32, %c0_i32_0 : i32, i32
  }
  func.func @transform_3(%arg0: i32) -> (i32, i32) {
    %c0_i32 = arith.constant 0 : i32
    %c0_i32_0 = arith.constant 0 : i32
    return %arg0, %c0_i32 : i32, i32
  }
}

</mosaic_0001>

<llo_original>
// kernel: tpu_custom_call.1
$region0: #{tpu_custom_call.1}
  #allocation0 [shape = 'u32[]', space=smem, size = 0x4, offset = 0x4, fixed_abs, tag = 'smem constant byte address 0x4 - core index']
  #allocation1 [shape = 'u32[144,128]{1,0:T(1,128)}', space=vmem, size = 0x12000, scoped, tag = 'internal scratch']
  %s0 = inlined_call_operand.hbm [shape: f32[1,8], index: 0, kind: input, shape index: {}]
  %s1 = inlined_call_operand.hbm [shape: f32[8,128], index: 1, kind: input, shape index: {}]
  %s2 = inlined_call_operand.vmem [shape: f32[1,128], index: 2, kind: input, shape index: {}]
  %s3 = inlined_call_operand.hbm [shape: f32[1,128], index: 3, kind: output, shape index: {}]
  %s4 = sld [smem:[#allocation0]]
  $region30: #{tpu_custom_call.1} parent=0
    _
  %s6 = ssub.s32 1, %s4
  %s7 = scalar_select 0, %s6, %s4
  $region1: #{tpu_custom_call.1} parent=0
    #allocation2 [shape = 'u8[512]{0}', space=vmem, size = 0x400, scoped, tag = 'input window, operand 0, single buffered']
    #allocation3 [shape = 's32[1]{0}', space=sflag, size = 0x4, scoped, tag = 'scoped memory for tpu_custom_call.1']
    #allocation4 [shape = 's32[1]{0}', space=sflag, size = 0x4, scoped, tag = 'scoped memory for tpu_custom_call.1']
    #allocation5 [shape = 'u8[4096]{0}', space=vmem, size = 0x1000, scoped, tag = 'input window, operand 1, single buffered']
    #allocation6 [shape = 's32[1]{0}', space=sflag, size = 0x4, scoped, tag = 'scoped memory for tpu_custom_call.1']
    #allocation7 [shape = 'u8[512]{0}', space=vmem, size = 0x400, scoped, tag = 'output window, operand 0, single buffered']
    %8 = vsyncpa [#allocation3], 0
    %9 = vsyncpa [#allocation6], 0
    %10 = vsyncpa [#allocation4], 0
    // Predicated region
    $region2: #{tpu_custom_call.1} parent=1 // pred_check
      _
    $region3: #{tpu_custom_call.1} parent=1 // pred_check_branch
      %12 = sbr.rel (0) target = $region5
    $region4: #{tpu_custom_call.1} parent=1 // pred_region
      %s14 = ssub.s32 16, 16
      %15 = vsyncadd [#allocation3], %s14
      %s17 = sshll.u32 [#allocation2], 4
      %s18 = int_to_ptr.vmem [resolvable:$true] %s17
      %20 = dma.hbm_to_vmem [thread:$0]  %s0, 16, %s18, [#allocation3]
    $region5: #{tpu_custom_call.1} parent=1 // pred_fallthru
      _
    // Predicated region
    $region6: #{tpu_custom_call.1} parent=1 // pred_check
      _
    $region7: #{tpu_custom_call.1} parent=1 // pred_check_branch
      %22 = sbr.rel (0) target = $region9
    $region8: #{tpu_custom_call.1} parent=1 // pred_region
      %s24 = ssub.s32 128, 128
      %25 = vsyncadd [#allocation6], %s24
      %s27 = sshll.u32 [#allocation5], 4
      %s28 = int_to_ptr.vmem [resolvable:$true] %s27
      %30 = dma.hbm_to_vmem [thread:$0]  %s1, 128, %s28, [#allocation6]
    $region9: #{tpu_custom_call.1} parent=1 // pred_fallthru
      _
    // Predicated region
    $region10: #{tpu_custom_call.1} parent=1 // pred_check
      _
    $region11: #{tpu_custom_call.1} parent=1 // pred_check_branch
      %32 = sbr.rel (0) target = $region13
    $region12: #{tpu_custom_call.1} parent=1 // pred_region
      _
    $region13: #{tpu_custom_call.1} parent=1 // pred_fallthru
      _
    // Predicated region
    $region14: #{tpu_custom_call.1} parent=1 // pred_check
      _
    $region15: #{tpu_custom_call.1} parent=1 // pred_check_branch
      %34 = sbr.rel (0) target = $region17
    $region16: #{tpu_custom_call.1} parent=1 // pred_region
      %35 = dma.done [#allocation3], 16
    $region17: #{tpu_custom_call.1} parent=1 // pred_fallthru
      _
    // Predicated region
    $region18: #{tpu_custom_call.1} parent=1 // pred_check
      _
    $region19: #{tpu_custom_call.1} parent=1 // pred_check_branch
      %37 = sbr.rel (0) target = $region21
    $region20: #{tpu_custom_call.1} parent=1 // pred_region
      %38 = dma.done [#allocation6], 128
    $region21: #{tpu_custom_call.1} parent=1 // pred_fallthru
      _
    %v39 = vld [vmem:[#allocation2] sm:$0x1]
    %v40 = vld [vmem:[#allocation5] sm:$0xff]
    %v41 = vld [vmem:[%s2] sm:$0x1]
    %vm42 = vcmask 64512
    %v44 = vsel %vm42, %v39, 0
    %46 = vmatprep.subr.mxu0 0.0
    %v47 = vand.u32 %v40, 4294901760
    %48 = vmatpush1.msra.mxu0 %v47
    %49 = vmatprep.subr.mxu0 0.0
    %50 = vmatpush1.msra.mxu0 0.0
    %51 = vmatprep.subr.mxu0 0.0
    %52 = vmatpush1.msra.mxu0 0.0
    %53 = vmatprep.subr.mxu0 0.0
    %54 = vmatpush1.msra.mxu0 0.0
    %55 = vmatprep.subr.mxu0 0.0
    %56 = vmatpush1.msra.mxu0 0.0
    %57 = vmatprep.subr.mxu0 0.0
    %58 = vmatpush1.msra.mxu0 0.0
    %59 = vmatprep.subr.mxu0 0.0
    %60 = vmatpush1.msra.mxu0 0.0
    %61 = vmatprep.subr.mxu0 0.0
    %62 = vmatpush1.msra.mxu0 0.0
    %63 = vmatprep.subr.mxu0 0.0
    %64 = vmatpush1.msra.mxu0 0.0
    %65 = vmatprep.subr.mxu0 0.0
    %66 = vmatpush1.msra.mxu0 0.0
    %67 = vmatprep.subr.mxu0 0.0
    %68 = vmatpush1.msra.mxu0 0.0
    %69 = vmatprep.subr.mxu0 0.0
    %70 = vmatpush1.msra.mxu0 0.0
    %71 = vmatprep.subr.mxu0 0.0
    %72 = vmatpush1.msra.mxu0 0.0
    %73 = vmatprep.subr.mxu0 0.0
    %74 = vmatpush1.msra.mxu0 0.0
    %75 = vmatprep.subr.mxu0 0.0
    %76 = vmatpush1.msra.mxu0 0.0
    %77 = vmatprep.subr.mxu0 0.0
    %78 = vmatpush1.msra.mxu0 0.0
    %79 = vmatprep.subr.mxu0 0.0
    %80 = vmatpush1.msra.mxu0 0.0
    %81 = vmatprep.subr.mxu0 0.0
    %82 = vmatpush1.msra.mxu0 0.0
    %83 = vmatprep.subr.mxu0 0.0
    %84 = vmatpush1.msra.mxu0 0.0
    %85 = vmatprep.subr.mxu0 0.0
    %86 = vmatpush1.msra.mxu0 0.0
    %87 = vmatprep.subr.mxu0 0.0
    %88 = vmatpush1.msra.mxu0 0.0
    %89 = vmatprep.subr.mxu0 0.0
    %90 = vmatpush1.msra.mxu0 0.0
    %91 = vmatprep.subr.mxu0 0.0
    %92 = vmatpush1.msra.mxu0 0.0
    %93 = vmatprep.subr.mxu0 0.0
    %94 = vmatpush1.msra.mxu0 0.0
    %95 = vmatprep.subr.mxu0 0.0
    %96 = vmatpush1.msra.mxu0 0.0
    %97 = vmatprep.subr.mxu0 0.0
    %98 = vmatpush1.msra.mxu0 0.0
    %99 = vmatprep.subr.mxu0 0.0
    %100 = vmatpush1.msra.mxu0 0.0
    %101 = vmatprep.subr.mxu0 0.0
    %102 = vmatpush1.msra.mxu0 0.0
    %103 = vmatprep.subr.mxu0 0.0
    %104 = vmatpush1.msra.mxu0 0.0
    %105 = vmatprep.subr.mxu0 0.0
    %106 = vmatpush1.msra.mxu0 0.0
    %107 = vmatprep.subr.mxu0 0.0
    %108 = vmatpush1.msra.mxu0 0.0
    %109 = vmatprep.subr.mxu0 0.0
    %110 = vmatpush1.msra.mxu0 0.0
    %111 = vmatprep.mubr.f32.mxu0 0.0
    %v112 = vand.u32 %v44, 4294901760
    %v113 = vsub.f32 %v44, %v112
    %v114 = vand.u32 %v113, 4294901760
    %v115 = vsub.f32 %v113, %v114
    %v116 = vand.u32 %v115, 4294901760
    %117 = vmatmul.mubr.f32.gmra.mrb[0].mxu0 %v116
    %v118 = vpop.f32.mrb[0].mxu0
    %v119 = vadd.f32 %v41, %v118
    %v120 = vpop.f32.mrb[0].mxu0
    %121 = vdwg.mxu0
    %122 = vmatprep.subr.mxu0 0.0
    %v123 = vand.u32 %v40, 4294901760
    %v124 = vsub.f32 %v40, %v123
    %v125 = vand.u32 %v124, 4294901760
    %v126 = vsub.f32 %v124, %v125
    %v127 = vand.u32 %v126, 4294901760
    %128 = vmatpush1.msra.mxu0 %v127
    %129 = vmatprep.subr.mxu0 0.0
    %130 = vmatpush1.msra.mxu0 0.0
    %131 = vmatprep.subr.mxu0 0.0
    %132 = vmatpush1.msra.mxu0 0.0
    %133 = vmatprep.subr.mxu0 0.0
    %134 = vmatpush1.msra.mxu0 0.0
    %135 = vmatprep.subr.mxu0 0.0
    %136 = vmatpush1.msra.mxu0 0.0
    %137 = vmatprep.subr.mxu0 0.0
    %138 = vmatpush1.msra.mxu0 0.0
    %139 = vmatprep.subr.mxu0 0.0
    %140 = vmatpush1.msra.mxu0 0.0
    %141 = vmatprep.subr.mxu0 0.0
    %142 = vmatpush1.msra.mxu0 0.0
    %143 = vmatprep.subr.mxu0 0.0
    %144 = vmatpush1.msra.mxu0 0.0
    %145 = vmatprep.subr.mxu0 0.0
    %146 = vmatpush1.msra.mxu0 0.0
    %147 = vmatprep.subr.mxu0 0.0
    %148 = vmatpush1.msra.mxu0 0.0
    %149 = vmatprep.subr.mxu0 0.0
    %150 = vmatpush1.msra.mxu0 0.0
    %151 = vmatprep.subr.mxu0 0.0
    %152 = vmatpush1.msra.mxu0 0.0
    %153 = vmatprep.subr.mxu0 0.0
    %154 = vmatpush1.msra.mxu0 0.0
    %155 = vmatprep.subr.mxu0 0.0
    %156 = vmatpush1.msra.mxu0 0.0
    %157 = vmatprep.subr.mxu0 0.0
    %158 = vmatpush1.msra.mxu0 0.0
    %159 = vmatprep.subr.mxu0 0.0
    %160 = vmatpush1.msra.mxu0 0.0
    %161 = vmatprep.subr.mxu0 0.0
    %162 = vmatpush1.msra.mxu0 0.0
    %163 = vmatprep.subr.mxu0 0.0
    %164 = vmatpush1.msra.mxu0 0.0
    %165 = vmatprep.subr.mxu0 0.0
    %166 = vmatpush1.msra.mxu0 0.0
    %167 = vmatprep.subr.mxu0 0.0
    %168 = vmatpush1.msra.mxu0 0.0
    %169 = vmatprep.subr.mxu0 0.0
    %170 = vmatpush1.msra.mxu0 0.0
    %171 = vmatprep.subr.mxu0 0.0
    %172 = vmatpush1.msra.mxu0 0.0
    %173 = vmatprep.subr.mxu0 0.0
    %174 = vmatpush1.msra.mxu0 0.0
    %175 = vmatprep.subr.mxu0 0.0
    %176 = vmatpush1.msra.mxu0 0.0
    %177 = vmatprep.subr.mxu0 0.0
    %178 = vmatpush1.msra.mxu0 0.0
    %179 = vmatprep.subr.mxu0 0.0
    %180 = vmatpush1.msra.mxu0 0.0
    %181 = vmatprep.subr.mxu0 0.0
    %182 = vmatpush1.msra.mxu0 0.0
    %183 = vmatprep.subr.mxu0 0.0
    %184 = vmatpush1.msra.mxu0 0.0
    %185 = vmatprep.subr.mxu0 0.0
    %186 = vmatpush1.msra.mxu0 0.0
    %187 = vmatprep.subr.mxu0 0.0
    %188 = vmatpush1.msra.mxu0 0.0
    %189 = vmatprep.subr.mxu0 0.0
    %190 = vmatpush1.msra.mxu0 0.0
    %191 = vmatprep.mubr.f32.mxu0 0.0
    %v192 = vand.u32 %v44, 4294901760
    %193 = vmatmul.mubr.f32.gmra.mrb[0].mxu0 %v192
    %v194 = vpop.f32.mrb[0].mxu0
    %v195 = vadd.f32 %v119, %v194
    %v196 = vpop.f32.mrb[0].mxu0
    %197 = vdwg.mxu0
    %198 = vmatprep.subr.mxu0 0.0
    %v199 = vand.u32 %v40, 4294901760
    %v200 = vsub.f32 %v40, %v199
    %201 = vmatpush1.msra.mxu0 %v200
    %202 = vmatprep.subr.mxu0 0.0
    %203 = vmatpush1.msra.mxu0 0.0
    %204 = vmatprep.subr.mxu0 0.0
    %205 = vmatpush1.msra.mxu0 0.0
    %206 = vmatprep.subr.mxu0 0.0
    %207 = vmatpush1.msra.mxu0 0.0
    %208 = vmatprep.subr.mxu0 0.0
    %209 = vmatpush1.msra.mxu0 0.0
    %210 = vmatprep.subr.mxu0 0.0
    %211 = vmatpush1.msra.mxu0 0.0
    %212 = vmatprep.subr.mxu0 0.0
    %213 = vmatpush1.msra.mxu0 0.0
    %214 = vmatprep.subr.mxu0 0.0
    %215 = vmatpush1.msra.mxu0 0.0
    %216 = vmatprep.subr.mxu0 0.0
    %217 = vmatpush1.msra.mxu0 0.0
    %218 = vmatprep.subr.mxu0 0.0
    %219 = vmatpush1.msra.mxu0 0.0
    %220 = vmatprep.subr.mxu0 0.0
    %221 = vmatpush1.msra.mxu0 0.0
    %222 = vmatprep.subr.mxu0 0.0
    %223 = vmatpush1.msra.mxu0 0.0
    %224 = vmatprep.subr.mxu0 0.0
    %225 = vmatpush1.msra.mxu0 0.0
    %226 = vmatprep.subr.mxu0 0.0
    %227 = vmatpush1.msra.mxu0 0.0
    %228 = vmatprep.subr.mxu0 0.0
    %229 = vmatpush1.msra.mxu0 0.0
    %230 = vmatprep.subr.mxu0 0.0
    %231 = vmatpush1.msra.mxu0 0.0
    %232 = vmatprep.subr.mxu0 0.0
    %233 = vmatpush1.msra.mxu0 0.0
    %234 = vmatprep.subr.mxu0 0.0
    %235 = vmatpush1.msra.mxu0 0.0
    %236 = vmatprep.subr.mxu0 0.0
    %237 = vmatpush1.msra.mxu0 0.0
    %238 = vmatprep.subr.mxu0 0.0
    %239 = vmatpush1.msra.mxu0 0.0
    %240 = vmatprep.subr.mxu0 0.0
    %241 = vmatpush1.msra.mxu0 0.0
    %242 = vmatprep.subr.mxu0 0.0
    %243 = vmatpush1.msra.mxu0 0.0
    %244 = vmatprep.subr.mxu0 0.0
    %245 = vmatpush1.msra.mxu0 0.0
    %246 = vmatprep.subr.mxu0 0.0
    %247 = vmatpush1.msra.mxu0 0.0
    %248 = vmatprep.subr.mxu0 0.0
    %249 = vmatpush1.msra.mxu0 0.0
    %250 = vmatprep.subr.mxu0 0.0
    %251 = vmatpush1.msra.mxu0 0.0
    %252 = vmatprep.subr.mxu0 0.0
    %253 = vmatpush1.msra.mxu0 0.0
    %254 = vmatprep.subr.mxu0 0.0
    %255 = vmatpush1.msra.mxu0 0.0
    %256 = vmatprep.subr.mxu0 0.0
    %257 = vmatpush1.msra.mxu0 0.0
    %258 = vmatprep.subr.mxu0 0.0
    %259 = vmatpush1.msra.mxu0 0.0
    %260 = vmatprep.subr.mxu0 0.0
    %261 = vmatpush1.msra.mxu0 0.0
    %262 = vmatprep.subr.mxu0 0.0
    %263 = vmatpush1.msra.mxu0 0.0
    %264 = vmatprep.mubr.f32.mxu0 0.0
    %v265 = vand.u32 %v44, 4294901760
    %v266 = vsub.f32 %v44, %v265
    %267 = vmatmul.mubr.f32.gmra.mrb[0].mxu0 %v266
    %v268 = vpop.f32.mrb[0].mxu0
    %v269 = vadd.f32 %v195, %v268
    %v270 = vpop.f32.mrb[0].mxu0
    %271 = vdwg.mxu0
    %272 = vmatprep.subr.mxu0 0.0
    %v273 = vand.u32 %v40, 4294901760
    %274 = vmatpush1.msra.mxu0 %v273
    %275 = vmatprep.subr.mxu0 0.0
    %276 = vmatpush1.msra.mxu0 0.0
    %277 = vmatprep.subr.mxu0 0.0
    %278 = vmatpush1.msra.mxu0 0.0
    %279 = vmatprep.subr.mxu0 0.0
    %280 = vmatpush1.msra.mxu0 0.0
    %281 = vmatprep.subr.mxu0 0.0
    %282 = vmatpush1.msra.mxu0 0.0
    %283 = vmatprep.subr.mxu0 0.0
    %284 = vmatpush1.msra.mxu0 0.0
    %285 = vmatprep.subr.mxu0 0.0
    %286 = vmatpush1.msra.mxu0 0.0
    %287 = vmatprep.subr.mxu0 0.0
    %288 = vmatpush1.msra.mxu0 0.0
    %289 = vmatprep.subr.mxu0 0.0
    %290 = vmatpush1.msra.mxu0 0.0
    %291 = vmatprep.subr.mxu0 0.0
    %292 = vmatpush1.msra.mxu0 0.0
    %293 = vmatprep.subr.mxu0 0.0
    %294 = vmatpush1.msra.mxu0 0.0
    %295 = vmatprep.subr.mxu0 0.0
    %296 = vmatpush1.msra.mxu0 0.0
    %297 = vmatprep.subr.mxu0 0.0
    %298 = vmatpush1.msra.mxu0 0.0
    %299 = vmatprep.subr.mxu0 0.0
    %300 = vmatpush1.msra.mxu0 0.0
    %301 = vmatprep.subr.mxu0 0.0
    %302 = vmatpush1.msra.mxu0 0.0
    %303 = vmatprep.subr.mxu0 0.0
    %304 = vmatpush1.msra.mxu0 0.0
    %305 = vmatprep.subr.mxu0 0.0
    %306 = vmatpush1.msra.mxu0 0.0
    %307 = vmatprep.subr.mxu0 0.0
    %308 = vmatpush1.msra.mxu0 0.0
    %309 = vmatprep.subr.mxu0 0.0
    %310 = vmatpush1.msra.mxu0 0.0
    %311 = vmatprep.subr.mxu0 0.0
    %312 = vmatpush1.msra.mxu0 0.0
    %313 = vmatprep.subr.mxu0 0.0
    %314 = vmatpush1.msra.mxu0 0.0
    %315 = vmatprep.subr.mxu0 0.0
    %316 = vmatpush1.msra.mxu0 0.0
    %317 = vmatprep.subr.mxu0 0.0
    %318 = vmatpush1.msra.mxu0 0.0
    %319 = vmatprep.subr.mxu0 0.0
    %320 = vmatpush1.msra.mxu0 0.0
    %321 = vmatprep.subr.mxu0 0.0
    %322 = vmatpush1.msra.mxu0 0.0
    %323 = vmatprep.subr.mxu0 0.0
    %324 = vmatpush1.msra.mxu0 0.0
    %325 = vmatprep.subr.mxu0 0.0
    %326 = vmatpush1.msra.mxu0 0.0
    %327 = vmatprep.subr.mxu0 0.0
    %328 = vmatpush1.msra.mxu0 0.0
    %329 = vmatprep.subr.mxu0 0.0
    %330 = vmatpush1.msra.mxu0 0.0
    %331 = vmatprep.subr.mxu0 0.0
    %332 = vmatpush1.msra.mxu0 0.0
    %333 = vmatprep.subr.mxu0 0.0
    %334 = vmatpush1.msra.mxu0 0.0
    %335 = vmatprep.subr.mxu0 0.0
    %336 = vmatpush1.msra.mxu0 0.0
    %337 = vmatprep.mubr.f32.mxu0 0.0
    %v338 = vand.u32 %v44, 4294901760
    %v339 = vsub.f32 %v44, %v338
    %v340 = vand.u32 %v339, 4294901760
    %341 = vmatmul.mubr.f32.gmra.mrb[0].mxu0 %v340
    %v342 = vpop.f32.mrb[0].mxu0
    %v343 = vadd.f32 %v269, %v342
    %v344 = vpop.f32.mrb[0].mxu0
    %345 = vdwg.mxu0
    %346 = vmatprep.subr.mxu0 0.0
    %v347 = vand.u32 %v40, 4294901760
    %v348 = vsub.f32 %v40, %v347
    %v349 = vand.u32 %v348, 4294901760
    %350 = vmatpush1.msra.mxu0 %v349
    %351 = vmatprep.subr.mxu0 0.0
    %352 = vmatpush1.msra.mxu0 0.0
    %353 = vmatprep.subr.mxu0 0.0
    %354 = vmatpush1.msra.mxu0 0.0
    %355 = vmatprep.subr.mxu0 0.0
    %356 = vmatpush1.msra.mxu0 0.0
    %357 = vmatprep.subr.mxu0 0.0
    %358 = vmatpush1.msra.mxu0 0.0
    %359 = vmatprep.subr.mxu0 0.0
    %360 = vmatpush1.msra.mxu0 0.0
    %361 = vmatprep.subr.mxu0 0.0
    %362 = vmatpush1.msra.mxu0 0.0
    %363 = vmatprep.subr.mxu0 0.0
    %364 = vmatpush1.msra.mxu0 0.0
    %365 = vmatprep.subr.mxu0 0.0
    %366 = vmatpush1.msra.mxu0 0.0
    %367 = vmatprep.subr.mxu0 0.0
    %368 = vmatpush1.msra.mxu0 0.0
    %369 = vmatprep.subr.mxu0 0.0
    %370 = vmatpush1.msra.mxu0 0.0
    %371 = vmatprep.subr.mxu0 0.0
    %372 = vmatpush1.msra.mxu0 0.0
    %373 = vmatprep.subr.mxu0 0.0
    %374 = vmatpush1.msra.mxu0 0.0
    %375 = vmatprep.subr.mxu0 0.0
    %376 = vmatpush1.msra.mxu0 0.0
    %377 = vmatprep.subr.mxu0 0.0
    %378 = vmatpush1.msra.mxu0 0.0
    %379 = vmatprep.subr.mxu0 0.0
    %380 = vmatpush1.msra.mxu0 0.0
    %381 = vmatprep.subr.mxu0 0.0
    %382 = vmatpush1.msra.mxu0 0.0
    %383 = vmatprep.subr.mxu0 0.0
    %384 = vmatpush1.msra.mxu0 0.0
    %385 = vmatprep.subr.mxu0 0.0
    %386 = vmatpush1.msra.mxu0 0.0
    %387 = vmatprep.subr.mxu0 0.0
    %388 = vmatpush1.msra.mxu0 0.0
    %389 = vmatprep.subr.mxu0 0.0
    %390 = vmatpush1.msra.mxu0 0.0
    %391 = vmatprep.subr.mxu0 0.0
    %392 = vmatpush1.msra.mxu0 0.0
    %393 = vmatprep.subr.mxu0 0.0
    %394 = vmatpush1.msra.mxu0 0.0
    %395 = vmatprep.subr.mxu0 0.0
    %396 = vmatpush1.msra.mxu0 0.0
    %397 = vmatprep.subr.mxu0 0.0
    %398 = vmatpush1.msra.mxu0 0.0
    %399 = vmatprep.subr.mxu0 0.0
    %400 = vmatpush1.msra.mxu0 0.0
    %401 = vmatprep.subr.mxu0 0.0
    %402 = vmatpush1.msra.mxu0 0.0
    %403 = vmatprep.subr.mxu0 0.0
    %404 = vmatpush1.msra.mxu0 0.0
    %405 = vmatprep.subr.mxu0 0.0
    %406 = vmatpush1.msra.mxu0 0.0
    %407 = vmatprep.subr.mxu0 0.0
    %408 = vmatpush1.msra.mxu0 0.0
    %409 = vmatprep.subr.mxu0 0.0
    %410 = vmatpush1.msra.mxu0 0.0
    %411 = vmatprep.subr.mxu0 0.0
    %412 = vmatpush1.msra.mxu0 0.0
    %413 = vmatprep.mubr.f32.mxu0 0.0
    %v414 = vand.u32 %v44, 4294901760
    %415 = vmatmul.mubr.f32.gmra.mrb[0].mxu0 %v414
    %v416 = vpop.f32.mrb[0].mxu0
    %v417 = vadd.f32 %v343, %v416
    %v418 = vpop.f32.mrb[0].mxu0
    %419 = vdwg.mxu0
    %420 = vmatprep.subr.mxu0 0.0
    %v421 = vand.u32 %v40, 4294901760
    %422 = vmatpush1.msra.mxu0 %v421
    %423 = vmatprep.subr.mxu0 0.0
    %424 = vmatpush1.msra.mxu0 0.0
    %425 = vmatprep.subr.mxu0 0.0
    %426 = vmatpush1.msra.mxu0 0.0
    %427 = vmatprep.subr.mxu0 0.0
    %428 = vmatpush1.msra.mxu0 0.0
    %429 = vmatprep.subr.mxu0 0.0
    %430 = vmatpush1.msra.mxu0 0.0
    %431 = vmatprep.subr.mxu0 0.0
    %432 = vmatpush1.msra.mxu0 0.0
    %433 = vmatprep.subr.mxu0 0.0
    %434 = vmatpush1.msra.mxu0 0.0
    %435 = vmatprep.subr.mxu0 0.0
    %436 = vmatpush1.msra.mxu0 0.0
    %437 = vmatprep.subr.mxu0 0.0
    %438 = vmatpush1.msra.mxu0 0.0
    %439 = vmatprep.subr.mxu0 0.0
    %440 = vmatpush1.msra.mxu0 0.0
    %441 = vmatprep.subr.mxu0 0.0
    %442 = vmatpush1.msra.mxu0 0.0
    %443 = vmatprep.subr.mxu0 0.0
    %444 = vmatpush1.msra.mxu0 0.0
    %445 = vmatprep.subr.mxu0 0.0
    %446 = vmatpush1.msra.mxu0 0.0
    %447 = vmatprep.subr.mxu0 0.0
    %448 = vmatpush1.msra.mxu0 0.0
    %449 = vmatprep.subr.mxu0 0.0
    %450 = vmatpush1.msra.mxu0 0.0
    %451 = vmatprep.subr.mxu0 0.0
    %452 = vmatpush1.msra.mxu0 0.0
    %453 = vmatprep.subr.mxu0 0.0
    %454 = vmatpush1.msra.mxu0 0.0
    %455 = vmatprep.subr.mxu0 0.0
    %456 = vmatpush1.msra.mxu0 0.0
    %457 = vmatprep.subr.mxu0 0.0
    %458 = vmatpush1.msra.mxu0 0.0
    %459 = vmatprep.subr.mxu0 0.0
    %460 = vmatpush1.msra.mxu0 0.0
    %461 = vmatprep.subr.mxu0 0.0
    %462 = vmatpush1.msra.mxu0 0.0
    %463 = vmatprep.subr.mxu0 0.0
    %464 = vmatpush1.msra.mxu0 0.0
    %465 = vmatprep.subr.mxu0 0.0
    %466 = vmatpush1.msra.mxu0 0.0
    %467 = vmatprep.subr.mxu0 0.0
    %468 = vmatpush1.msra.mxu0 0.0
    %469 = vmatprep.subr.mxu0 0.0
    %470 = vmatpush1.msra.mxu0 0.0
    %471 = vmatprep.subr.mxu0 0.0
    %472 = vmatpush1.msra.mxu0 0.0
    %473 = vmatprep.subr.mxu0 0.0
    %474 = vmatpush1.msra.mxu0 0.0
    %475 = vmatprep.subr.mxu0 0.0
    %476 = vmatpush1.msra.mxu0 0.0
    %477 = vmatprep.subr.mxu0 0.0
    %478 = vmatpush1.msra.mxu0 0.0
    %479 = vmatprep.subr.mxu0 0.0
    %480 = vmatpush1.msra.mxu0 0.0
    %481 = vmatprep.subr.mxu0 0.0
    %482 = vmatpush1.msra.mxu0 0.0
    %483 = vmatprep.subr.mxu0 0.0
    %484 = vmatpush1.msra.mxu0 0.0
    %485 = vmatprep.mubr.f32.mxu0 0.0
    %v486 = vand.u32 %v44, 4294901760
    %487 = vmatmul.mubr.f32.gmra.mrb[0].mxu0 %v486
    %v488 = vpop.f32.mrb[0].mxu0
    %v489 = vadd.f32 %v417, %v488
    %v490 = vpop.f32.mrb[0].mxu0
    %491 = vdwg.mxu0
    %v492 = vand.u32 2147483647, %v489
    %vm493 = vcmp.le.f32.partialorder %v492, 0.7853982
    %vm494 = vcmp.lt.s32.totalorder %v489, 0
    %v495 = vand.u32 %v489, 2139095040
    %v496 = vshrl.u32 %v495, 23
    %v497 = vsub.s32 %v496, 127
    %v498 = vand.u32 2147483647, %v489
    %v499 = vand.u32 %v498, 8388607
    %v500 = vor.u32 %v499, 8388608
    %v501 = vsub.s32 0, %v500
    %v502 = vadd.s32 %v497, 1
    %vm503 = vcmp.gt.s32.totalorder %v502, 0
    %v504 = vsel %vm503, %v502, 0
    %v505 = vshrl.u32 %v504, 5
    %v506 = vand.u32 %v504, 31
    %v507 = vsub.s32 32, %v506
    %v508 = vshrl.u32 683565275, %v507
    %v509 = vshll.u32 683565275, %v506
    %v510 = vshrl.u32 2475754826, %v507
    %v511 = vor.u32 %v509, %v510
    %v512 = vshll.u32 2475754826, %v506
    %v513 = vshrl.u32 2131351028, %v507
    %v514 = vor.u32 %v512, %v513
    %v515 = vshll.u32 2131351028, %v506
    %v516 = vshrl.u32 2102212464, %v507
    %v517 = vor.u32 %v515, %v516
    %v518 = vshll.u32 2102212464, %v506
    %v519 = vshrl.u32 920167782, %v507
    %v520 = vor.u32 %v518, %v519
    %v521 = vshll.u32 920167782, %v506
    %v522 = vshrl.u32 1326507024, %v507
    %v523 = vor.u32 %v521, %v522
    %vm524 = vcmp.lt.s32.totalorder %v505, 1
    %vm525 = vcmp.lt.s32.totalorder %v505, 2
    %vm526 = vcmp.lt.s32.totalorder %v505, 3
    %vm527 = vcmp.lt.s32.totalorder %v505, 4
    %v528 = vsel %vm524, %v508, %v511
    %v529 = vsel %vm527, %v517, 2102212464
    %v530 = vsel %vm526, %v514, %v529
    %v531 = vsel %vm525, %v528, %v530
    %v532 = vsel %vm524, %v511, %v514
    %v533 = vsel %vm527, %v520, 920167782
    %v534 = vsel %vm526, %v517, %v533
    %v535 = vsel %vm525, %v532, %v534
    %v536 = vsel %vm524, %v514, %v517
    %v537 = vsel %vm527, %v523, 1326507024
    %v538 = vsel %vm526, %v520, %v537
    %v539 = vsel %vm525, %v536, %v538
    %v540 = vshll.u32 %v500, 8
    %v541 = vmul.u32.u64.compose %v540, %v539
    %v542 = vextract.low.u32 %v541
    %v543 = vextract.high.u32 %v541
    %v544 = vmul.u32.u64.compose %v540, %v535
    %v545 = vextract.low.u32 %v544
    %v546 = vextract.high.u32 %v544
    %v547 = vmul.u32 %v540, %v531
    %v548 = vadd.s32 %v543, %v545
    %vm549 = vc.u32 %v543, %v545
    %v550 = vadd.s32 %v546, 1
    %v551 = vsel %vm549, %v550, %v546
    %v552 = vadd.s32 %v547, %v551
    %v553 = vadd.s32 %v552, 536870912
    %v554 = vshrl.u32 %v553, 30
    %v555 = vshll.u32 %v554, 30
    %v556 = vsub.s32 %v552, %v555
    %vm557 = vcmp.lt.s32.totalorder %v556, 0
    %v558 = vsub.s32 0, %v556
    %v559 = vsel %vm557, %v558, %v556
    %v560 = vclz %v559
    %v561 = vsub.s32 %v560, 2
    %vm562 = vcmp.gt.s32.totalorder 0, %v561
    %v563 = vsel %vm562, 0, %v561
    %v564 = vsub.s32 32, %v563
    %v565 = vshll.u32 %v556, %v563
    %v566 = vshrl.u32 %v548, %v564
    %v567 = vor.u32 %v565, %v566
    %v568 = vsub.s32 4294967266, %v563
    %v569 = vadd.s32 %v568, 127
    %v570 = vshll.u32 %v569, 23
    %v571 = vor.u32 4788187, %v570
    %v572 = vand.u32 2147483647, %v571
    %v574 = vcvt.s32.f32 %v567
    %v575 = vmul.f32 %v574, %v572
    %v576 = vxor.u32 %v575, 2147483648
    %v577 = vsel %vm494, %v576, %v575
    %v578 = vsub.s32 4, %v554
    %v579 = vsel %vm494, %v578, %v554
    %v580 = vsel %vm493, %v489, %v577
    %v581 = vsel %vm493, 0, %v579
    %v582 = vcosq.f32.pop %v580
    %v583 = vsinq.f32.pop %v580
    %vm584 = vweird.f32 %v489
    %v585 = vadd.s32 %v581, 3
    %v586 = vand.u32 %v585, 3
    %vm587 = vcmp.lt.s32.totalorder %v586, 2
    %vm588 = vcmp.eq.s32.totalorder %v586, 0
    %v589 = vxor.u32 %v583, 2147483648
    %v590 = vsel %vm588, %v582, %v589
    %vm591 = vcmp.eq.s32.totalorder %v586, 2
    %v592 = vxor.u32 %v582, 2147483648
    %v593 = vsel %vm591, %v592, %v583
    %v594 = vsel %vm587, %v590, %v593
    %v595 = vsel %vm584, nan, %v594
    %596 = vst [vmem:[#allocation7] sm:$0x1] %v595
    // Predicated region
    $region22: #{tpu_custom_call.1} parent=1 // pred_check
      _
    $region23: #{tpu_custom_call.1} parent=1 // pred_check_branch
      %598 = sbr.rel (0) target = $region25
    $region24: #{tpu_custom_call.1} parent=1 // pred_region
      %s600 = ssub.s32 16, 16
      %601 = vsyncadd [#allocation4], %s600
      %s603 = sshll.u32 [#allocation7], 4
      %s604 = int_to_ptr.vmem [resolvable:$true] %s603
      %606 = dma.vmem_to_hbm [thread:$0]  %s604, 16, %s3, [#allocation4]
    $region25: #{tpu_custom_call.1} parent=1 // pred_fallthru
      _
    // Predicated region
    $region26: #{tpu_custom_call.1} parent=1 // pred_check
      _
    $region27: #{tpu_custom_call.1} parent=1 // pred_check_branch
      %608 = sbr.rel (0) target = $region29
    $region28: #{tpu_custom_call.1} parent=1 // pred_region
      %609 = dma.done [#allocation4], 16
    $region29: #{tpu_custom_call.1} parent=1 // pred_fallthru
      _
    %610 = vsyncpa [#allocation3], 1
    %611 = vsyncpa [#allocation6], 1
    %612 = vsyncpa [#allocation4], 1

</llo_original>
